<compile_context>
chip_gen: v7x
topology: tpu7x:2x2x1
jax: 0.10.0
libtpu: 0.0.40
codegen_flags: <defaults>
</compile_context>

<pallas_src>
import functools

import jax
import jax.numpy as jnp
from jax import lax
from jax.experimental import pallas as pl
from jax.experimental.pallas import tpu as pltpu


def _largest_tile(n, cap):
    """Largest multiple of 128 that divides n and is <= cap (falls back to n)."""
    if n % 128 != 0:
        return n
    t = max(128, (min(n, cap) // 128) * 128)
    while n % t != 0:
        t -= 128
    return t


def _pass1_kernel(f1_ref, f2_ref, f3_ref, y_ref, pos_ref, neg_ref, *, inv_tau):
    first = jnp.logical_and(pl.program_id(0) == 0, pl.program_id(1) == 0)

    f1 = f1_ref[0].astype(jnp.float32)   # (C, T)
    f2 = f2_ref[0].astype(jnp.float32)
    f3 = f3_ref[0].astype(jnp.float32)
    y = y_ref[0].astype(jnp.float32)

    def inv_norm(x):
        # 1 / max(||x||_2, 1e-12)  (torch F.normalize eps); rsqrt runs on the EUP.
        ss = jnp.sum(x * x, axis=0, keepdims=True)            # (1, T)
        return jnp.minimum(lax.rsqrt(ss), 1e12)

    i1, i2, i3, iy = inv_norm(f1), inv_norm(f2), inv_norm(f3), inv_norm(y)

    def sim(a, ia, c, ic):
        # cosine similarity over the channel axis, then clamp(.../tau, -50, 50)
        cos = jnp.sum(a * c, axis=0, keepdims=True) * ia * ic  # (1, T)
        return jnp.clip(cos * inv_tau, -50.0, 50.0)

    pos = jnp.concatenate(
        [jnp.exp(sim(f1, i1, y, iy)),
         jnp.exp(sim(f2, i2, y, iy)),
         jnp.exp(sim(f3, i3, y, iy))], axis=0)                 # (3, T)
    pos_ref[0] = pos

    @pl.when(first)
    def _():
        neg_ref[0, 0] = 0.0
        neg_ref[0, 1] = 0.0
        neg_ref[0, 2] = 0.0

    # neg_F1 = sum(exp(sim13)); neg_F2 / neg_F3 = exp(sum(...)) -> keep raw sums.
    neg_ref[0, 0] += jnp.sum(jnp.exp(sim(f1, i1, f3, i3)))
    neg_ref[0, 1] += jnp.sum(sim(f2, i2, f1, i1))
    neg_ref[0, 2] += jnp.sum(sim(f3, i3, f2, i2))


def _pass2_kernel(negs_ref, pos_ref, out_ref, *, inv_n):
    first = jnp.logical_and(pl.program_id(0) == 0, pl.program_id(1) == 0)

    @pl.when(first)
    def _():
        out_ref[0, 0] = 0.0

    neg1 = negs_ref[0, 0]
    neg2 = negs_ref[0, 1]
    neg3 = negs_ref[0, 2]

    pos = pos_ref[0]                      # (3, T)
    p1 = pos[0:1, :]
    p2 = pos[1:2, :]
    p3 = pos[2:3, :]
    eps = 1e-6
    l1 = -jnp.log(jnp.maximum(p1 / (p1 + neg1 + eps), eps))
    l2 = -jnp.log(jnp.maximum(p2 / (p2 + neg2 + eps), eps))
    l3 = -jnp.log(jnp.maximum(p3 / (p3 + neg3 + eps), eps))
    out_ref[0, 0] += jnp.sum(l1 + l2 + l3) * inv_n


def contrastive_loss_pallas(q_F1, q_F2, q_F3, pseudo_Yf, temperature=0.07):
    B, C, H, W = q_F1.shape
    HW = H * W
    N = B * HW
    smem = pltpu.MemorySpace.SMEM

    # Pass-1 tile: biggest pixel tile whose 4 double-buffered (C, tile) input
    # blocks (+ the double-buffered (3, tile) output block) stay well inside the
    # default scoped-VMEM budget.
    bytes_per_lane = 4 * 2 * C * 4 + 2 * 3 * 4
    cap1 = max(128, (12 * 1024 * 1024) // bytes_per_lane)
    tile1 = _largest_tile(HW, min(cap1, 4096))
    nt1 = HW // tile1

    # Pass-2 tile: the (3, tile) positive blocks are tiny; use large tiles to
    # amortize the per-grid-step overhead.
    tile2 = _largest_tile(HW, 8192)
    nt2 = HW // tile2

    def as_3d(x):
        return x.reshape(B, C, HW)        # free view of NCHW (no transpose copy)

    f1, f2, f3, y = (as_3d(a) for a in (q_F1, q_F2, q_F3, pseudo_Yf))

    in_spec = pl.BlockSpec((1, C, tile1), lambda b, t: (b, 0, t))

    pos, neg_raw = pl.pallas_call(
        functools.partial(_pass1_kernel, inv_tau=1.0 / float(temperature)),
        grid=(B, nt1),
        in_specs=[in_spec] * 4,
        out_specs=(
            pl.BlockSpec((1, 3, tile1), lambda b, t: (b, 0, t)),
            pl.BlockSpec(memory_space=smem),
        ),
        out_shape=(
            jax.ShapeDtypeStruct((B, 3, HW), jnp.float32),
            jax.ShapeDtypeStruct((1, 3), jnp.float32),
        ),
        compiler_params=pltpu.CompilerParams(
            dimension_semantics=("arbitrary", "arbitrary")),
    )(f1, f2, f3, y)

    # Tiny scalar epilogue math (3 values) in plain JAX: exp() of the two
    # globally-summed negative terms; neg_F1 is already a sum of exps.
    negs = jnp.stack(
        [neg_raw[0, 0], jnp.exp(neg_raw[0, 1]), jnp.exp(neg_raw[0, 2])]
    ).reshape(1, 3).astype(jnp.float32)

    out = pl.pallas_call(
        functools.partial(_pass2_kernel, inv_n=1.0 / float(N)),
        grid=(B, nt2),
        in_specs=[
            pl.BlockSpec(memory_space=smem),
            pl.BlockSpec((1, 3, tile2), lambda b, t: (b, 0, t)),
        ],
        out_specs=pl.BlockSpec(memory_space=smem),
        out_shape=jax.ShapeDtypeStruct((1, 1), jnp.float32),
        compiler_params=pltpu.CompilerParams(
            dimension_semantics=("arbitrary", "arbitrary")),
    )(negs, pos)
    return out[0, 0]


def contrastive_loss_ref(q_F1, q_F2, q_F3, pseudo_Yf, temperature=0.07):
    """Pure-JAX reference mirroring the PyTorch module (NCHW inputs)."""
    tau = temperature

    def norm(x):
        n = jnp.sqrt(jnp.sum(x * x, axis=1, keepdims=True))
        return x / jnp.maximum(n, 1e-12)

    def cos(a, b):
        dot = jnp.sum(a * b, axis=1)
        na = jnp.sqrt(jnp.sum(a * a, axis=1))
        nb = jnp.sqrt(jnp.sum(b * b, axis=1))
        return dot / jnp.maximum(na * nb, 1e-8)

    n1, n2, n3, ny = norm(q_F1), norm(q_F2), norm(q_F3), norm(pseudo_Yf)
    sim = lambda a, b: jnp.clip(cos(a, b) / tau, -50.0, 50.0)
    pos1, pos2, pos3 = jnp.exp(sim(n1, ny)), jnp.exp(sim(n2, ny)), jnp.exp(sim(n3, ny))
    neg1 = jnp.sum(jnp.exp(sim(n1, n3)))
    neg2 = jnp.exp(jnp.sum(sim(n2, n1)))
    neg3 = jnp.exp(jnp.sum(sim(n3, n2)))
    eps = 1e-6
    l1 = -jnp.log(jnp.maximum(pos1 / (pos1 + neg1 + eps), eps))
    l2 = -jnp.log(jnp.maximum(pos2 / (pos2 + neg2 + eps), eps))
    l3 = -jnp.log(jnp.maximum(pos3 / (pos3 + neg3 + eps), eps))
    return jnp.mean(l1 + l2 + l3)


if __name__ == "__main__":
    B, C, H, W = 2, 4, 16, 16
    key = jax.random.PRNGKey(0)
    k1, k2, k3, k4 = jax.random.split(key, 4)
    q_F1 = jax.random.normal(k1, (B, C, H, W), dtype=jnp.float32)
    q_F2 = jax.random.normal(k2, (B, C, H, W), dtype=jnp.float32)
    q_F3 = jax.random.normal(k3, (B, C, H, W), dtype=jnp.float32)
    pseudo_Yf = jax.random.normal(k4, (B, C, H, W), dtype=jnp.float32)

    fn = jax.jit(lambda a, b, c, d: contrastive_loss_pallas(a, b, c, d,
                                                            temperature=0.07))
    loss = jax.block_until_ready(fn(q_F1, q_F2, q_F3, pseudo_Yf))

    ref = jax.block_until_ready(
        contrastive_loss_ref(q_F1, q_F2, q_F3, pseudo_Yf, temperature=0.07)
    )
    assert jnp.allclose(loss, ref, rtol=1e-3, atol=1e-3), (loss, ref)

    print("KERNEL_OK")
</pallas_src>

<mosaic_0001>
module attributes {stable_mosaic.version = 11 : i64} {
  func.func @_pass1_kernel(%arg0: i32, %arg1: i32, %arg2: memref<1x4x256xf32, #tpu.memory_space<vmem>>, %arg3: memref<1x4x256xf32, #tpu.memory_space<vmem>>, %arg4: memref<1x4x256xf32, #tpu.memory_space<vmem>>, %arg5: memref<1x4x256xf32, #tpu.memory_space<vmem>>, %arg6: memref<1x3x256xf32, #tpu.memory_space<vmem>>, %arg7: memref<1x3xf32, #tpu.memory_space<smem>>) attributes {dimension_semantics = [#tpu.dimension_semantics<arbitrary>, #tpu.dimension_semantics<arbitrary>], iteration_bounds = array<i64: 2, 1>, scalar_prefetch = 0 : i64, scratch_operands = 0 : i64, tpu.core_type = #tpu.core_type<tc>, window_params = [{transform_indices = @transform_0, window_bounds = array<i64: 1, 4, 256>}, {transform_indices = @transform_1, window_bounds = array<i64: 1, 4, 256>}, {transform_indices = @transform_2, window_bounds = array<i64: 1, 4, 256>}, {transform_indices = @transform_3, window_bounds = array<i64: 1, 4, 256>}, {transform_indices = @transform_4, window_bounds = array<i64: 1, 3, 256>}, {transform_indices = @transform_5, window_bounds = array<i64: 1, 3>}]} {
    %c0_i32 = arith.constant 0 : i32
    %0 = arith.cmpi eq, %arg0, %c0_i32 : i32
    %c0_i32_0 = arith.constant 0 : i32
    %1 = arith.cmpi eq, %arg1, %c0_i32_0 : i32
    %2 = arith.andi %0, %1 : i1
    %c0 = arith.constant 0 : index
    %c0_1 = arith.constant 0 : index
    %c0_2 = arith.constant 0 : index
    %3 = vector.load %arg2[%c0, %c0_1, %c0_2] : memref<1x4x256xf32, #tpu.memory_space<vmem>>, vector<1x4x256xf32>
    %4 = vector.shape_cast %3 : vector<1x4x256xf32> to vector<4x256xf32>
    %c0_3 = arith.constant 0 : index
    %c0_4 = arith.constant 0 : index
    %c0_5 = arith.constant 0 : index
    %5 = vector.load %arg3[%c0_3, %c0_4, %c0_5] : memref<1x4x256xf32, #tpu.memory_space<vmem>>, vector<1x4x256xf32>
    %6 = vector.shape_cast %5 : vector<1x4x256xf32> to vector<4x256xf32>
    %c0_6 = arith.constant 0 : index
    %c0_7 = arith.constant 0 : index
    %c0_8 = arith.constant 0 : index
    %7 = vector.load %arg4[%c0_6, %c0_7, %c0_8] : memref<1x4x256xf32, #tpu.memory_space<vmem>>, vector<1x4x256xf32>
    %8 = vector.shape_cast %7 : vector<1x4x256xf32> to vector<4x256xf32>
    %c0_9 = arith.constant 0 : index
    %c0_10 = arith.constant 0 : index
    %c0_11 = arith.constant 0 : index
    %9 = vector.load %arg5[%c0_9, %c0_10, %c0_11] : memref<1x4x256xf32, #tpu.memory_space<vmem>>, vector<1x4x256xf32>
    %10 = vector.shape_cast %9 : vector<1x4x256xf32> to vector<4x256xf32>
    %11 = arith.mulf %4, %4 : vector<4x256xf32>
    %cst = arith.constant dense<0.000000e+00> : vector<256xf32>
    %12 = vector.multi_reduction <add>, %11, %cst [0] : vector<4x256xf32> to vector<256xf32>
    %13 = vector.shape_cast %12 : vector<256xf32> to vector<1x256xf32>
    %14 = math.rsqrt %13 : vector<1x256xf32>
    %cst_12 = arith.constant 9.99999995E+11 : f32
    %15 = vector.broadcast %cst_12 : f32 to vector<1x256xf32>
    %16 = arith.minimumf %14, %15 : vector<1x256xf32>
    %17 = arith.mulf %6, %6 : vector<4x256xf32>
    %cst_13 = arith.constant dense<0.000000e+00> : vector<256xf32>
    %18 = vector.multi_reduction <add>, %17, %cst_13 [0] : vector<4x256xf32> to vector<256xf32>
    %19 = vector.shape_cast %18 : vector<256xf32> to vector<1x256xf32>
    %20 = math.rsqrt %19 : vector<1x256xf32>
    %cst_14 = arith.constant 9.99999995E+11 : f32
    %21 = vector.broadcast %cst_14 : f32 to vector<1x256xf32>
    %22 = arith.minimumf %20, %21 : vector<1x256xf32>
    %23 = arith.mulf %8, %8 : vector<4x256xf32>
    %cst_15 = arith.constant dense<0.000000e+00> : vector<256xf32>
    %24 = vector.multi_reduction <add>, %23, %cst_15 [0] : vector<4x256xf32> to vector<256xf32>
    %25 = vector.shape_cast %24 : vector<256xf32> to vector<1x256xf32>
    %26 = math.rsqrt %25 : vector<1x256xf32>
    %cst_16 = arith.constant 9.99999995E+11 : f32
    %27 = vector.broadcast %cst_16 : f32 to vector<1x256xf32>
    %28 = arith.minimumf %26, %27 : vector<1x256xf32>
    %29 = arith.mulf %10, %10 : vector<4x256xf32>
    %cst_17 = arith.constant dense<0.000000e+00> : vector<256xf32>
    %30 = vector.multi_reduction <add>, %29, %cst_17 [0] : vector<4x256xf32> to vector<256xf32>
    %31 = vector.shape_cast %30 : vector<256xf32> to vector<1x256xf32>
    %32 = math.rsqrt %31 : vector<1x256xf32>
    %cst_18 = arith.constant 9.99999995E+11 : f32
    %33 = vector.broadcast %cst_18 : f32 to vector<1x256xf32>
    %34 = arith.minimumf %32, %33 : vector<1x256xf32>
    %35 = arith.mulf %4, %10 : vector<4x256xf32>
    %cst_19 = arith.constant dense<0.000000e+00> : vector<256xf32>
    %36 = vector.multi_reduction <add>, %35, %cst_19 [0] : vector<4x256xf32> to vector<256xf32>
    %37 = vector.shape_cast %36 : vector<256xf32> to vector<1x256xf32>
    %38 = arith.mulf %37, %16 : vector<1x256xf32>
    %39 = arith.mulf %38, %34 : vector<1x256xf32>
    %cst_20 = arith.constant 14.2857141 : f32
    %40 = vector.broadcast %cst_20 : f32 to vector<1x256xf32>
    %41 = arith.mulf %39, %40 : vector<1x256xf32>
    %cst_21 = arith.constant -5.000000e+01 : f32
    %cst_22 = arith.constant 5.000000e+01 : f32
    %42 = vector.broadcast %cst_21 : f32 to vector<1x256xf32>
    %43 = arith.maximumf %42, %41 : vector<1x256xf32>
    %44 = vector.broadcast %cst_22 : f32 to vector<1x256xf32>
    %45 = arith.minimumf %44, %43 : vector<1x256xf32>
    %46 = math.exp %45 : vector<1x256xf32>
    %47 = arith.mulf %6, %10 : vector<4x256xf32>
    %cst_23 = arith.constant dense<0.000000e+00> : vector<256xf32>
    %48 = vector.multi_reduction <add>, %47, %cst_23 [0] : vector<4x256xf32> to vector<256xf32>
    %49 = vector.shape_cast %48 : vector<256xf32> to vector<1x256xf32>
    %50 = arith.mulf %49, %22 : vector<1x256xf32>
    %51 = arith.mulf %50, %34 : vector<1x256xf32>
    %cst_24 = arith.constant 14.2857141 : f32
    %52 = vector.broadcast %cst_24 : f32 to vector<1x256xf32>
    %53 = arith.mulf %51, %52 : vector<1x256xf32>
    %cst_25 = arith.constant -5.000000e+01 : f32
    %cst_26 = arith.constant 5.000000e+01 : f32
    %54 = vector.broadcast %cst_25 : f32 to vector<1x256xf32>
    %55 = arith.maximumf %54, %53 : vector<1x256xf32>
    %56 = vector.broadcast %cst_26 : f32 to vector<1x256xf32>
    %57 = arith.minimumf %56, %55 : vector<1x256xf32>
    %58 = math.exp %57 : vector<1x256xf32>
    %59 = arith.mulf %8, %10 : vector<4x256xf32>
    %cst_27 = arith.constant dense<0.000000e+00> : vector<256xf32>
    %60 = vector.multi_reduction <add>, %59, %cst_27 [0] : vector<4x256xf32> to vector<256xf32>
    %61 = vector.shape_cast %60 : vector<256xf32> to vector<1x256xf32>
    %62 = arith.mulf %61, %28 : vector<1x256xf32>
    %63 = arith.mulf %62, %34 : vector<1x256xf32>
    %cst_28 = arith.constant 14.2857141 : f32
    %64 = vector.broadcast %cst_28 : f32 to vector<1x256xf32>
    %65 = arith.mulf %63, %64 : vector<1x256xf32>
    %cst_29 = arith.constant -5.000000e+01 : f32
    %cst_30 = arith.constant 5.000000e+01 : f32
    %66 = vector.broadcast %cst_29 : f32 to vector<1x256xf32>
    %67 = arith.maximumf %66, %65 : vector<1x256xf32>
    %68 = vector.broadcast %cst_30 : f32 to vector<1x256xf32>
    %69 = arith.minimumf %68, %67 : vector<1x256xf32>
    %70 = math.exp %69 : vector<1x256xf32>
    %71 = tpu.concatenate %46, %58, %70 in 0 : vector<1x256xf32>, vector<1x256xf32>, vector<1x256xf32> -> vector<3x256xf32>
    %c0_31 = arith.constant 0 : index
    %c0_32 = arith.constant 0 : index
    %c0_33 = arith.constant 0 : index
    %72 = vector.load %arg6[%c0_31, %c0_32, %c0_33] : memref<1x3x256xf32, #tpu.memory_space<vmem>>, vector<1x3x256xf32>
    %73 = vector.shape_cast %72 : vector<1x3x256xf32> to vector<3x256xf32>
    %74 = vector.shape_cast %71 : vector<3x256xf32> to vector<1x3x256xf32>
    tpu.vector_store %arg6[%c0_31, %c0_32, %c0_33], %74 {strides = array<i32>} : memref<1x3x256xf32, #tpu.memory_space<vmem>>, vector<1x3x256xf32>,
    %75 = arith.extui %2 : i1 to i32
    %c0_i32_34 = arith.constant 0 : i32
    %76 = arith.cmpi ne, %75, %c0_i32_34 : i32
    scf.if %76 {
      %cst_60 = arith.constant 0.000000e+00 : f32
      %c0_61 = arith.constant 0 : index
      %c0_62 = arith.constant 0 : index
      %132 = memref.load %arg7[%c0_61, %c0_62] : memref<1x3xf32, #tpu.memory_space<smem>>
      memref.store %cst_60, %arg7[%c0_61, %c0_62] : memref<1x3xf32, #tpu.memory_space<smem>>
      %cst_63 = arith.constant 0.000000e+00 : f32
      %c0_64 = arith.constant 0 : index
      %c1_65 = arith.constant 1 : index
      %133 = memref.load %arg7[%c0_64, %c1_65] : memref<1x3xf32, #tpu.memory_space<smem>>
      memref.store %cst_63, %arg7[%c0_64, %c1_65] : memref<1x3xf32, #tpu.memory_space<smem>>
      %cst_66 = arith.constant 0.000000e+00 : f32
      %c0_67 = arith.constant 0 : index
      %c2_68 = arith.constant 2 : index
      %134 = memref.load %arg7[%c0_67, %c2_68] : memref<1x3xf32, #tpu.memory_space<smem>>
      memref.store %cst_66, %arg7[%c0_67, %c2_68] : memref<1x3xf32, #tpu.memory_space<smem>>
    } else {
    }
    %c0_35 = arith.constant 0 : index
    %c0_36 = arith.constant 0 : index
    %77 = memref.load %arg7[%c0_35, %c0_36] : memref<1x3xf32, #tpu.memory_space<smem>>
    %78 = arith.mulf %4, %8 : vector<4x256xf32>
    %cst_37 = arith.constant dense<0.000000e+00> : vector<256xf32>
    %79 = vector.multi_reduction <add>, %78, %cst_37 [0] : vector<4x256xf32> to vector<256xf32>
    %80 = vector.shape_cast %79 : vector<256xf32> to vector<1x256xf32>
    %81 = arith.mulf %80, %16 : vector<1x256xf32>
    %82 = arith.mulf %81, %28 : vector<1x256xf32>
    %cst_38 = arith.constant 14.2857141 : f32
    %83 = vector.broadcast %cst_38 : f32 to vector<1x256xf32>
    %84 = arith.mulf %82, %83 : vector<1x256xf32>
    %cst_39 = arith.constant -5.000000e+01 : f32
    %cst_40 = arith.constant 5.000000e+01 : f32
    %85 = vector.broadcast %cst_39 : f32 to vector<1x256xf32>
    %86 = arith.maximumf %85, %84 : vector<1x256xf32>
    %87 = vector.broadcast %cst_40 : f32 to vector<1x256xf32>
    %88 = arith.minimumf %87, %86 : vector<1x256xf32>
    %89 = math.exp %88 : vector<1x256xf32>
    %90 = vector.shape_cast %89 : vector<1x256xf32> to vector<1x1x256xf32>
    %cst_41 = arith.constant dense<0.000000e+00> : vector<1xf32>
    %91 = vector.multi_reduction <add>, %90, %cst_41 [1, 2] : vector<1x1x256xf32> to vector<1xf32>
    %92 = vector.shape_cast %91 : vector<1xf32> to vector<1x1x1xf32>
    %93 = vector.extract %92[0, 0, 0] : f32 from vector<1x1x1xf32>
    %94 = arith.addf %77, %93 : f32
    %c0_42 = arith.constant 0 : index
    %c0_43 = arith.constant 0 : index
    %95 = memref.load %arg7[%c0_42, %c0_43] : memref<1x3xf32, #tpu.memory_space<smem>>
    memref.store %94, %arg7[%c0_42, %c0_43] : memref<1x3xf32, #tpu.memory_space<smem>>
    %c0_44 = arith.constant 0 : index
    %c1 = arith.constant 1 : index
    %96 = memref.load %arg7[%c0_44, %c1] : memref<1x3xf32, #tpu.memory_space<smem>>
    %97 = arith.mulf %6, %4 : vector<4x256xf32>
    %cst_45 = arith.constant dense<0.000000e+00> : vector<256xf32>
    %98 = vector.multi_reduction <add>, %97, %cst_45 [0] : vector<4x256xf32> to vector<256xf32>
    %99 = vector.shape_cast %98 : vector<256xf32> to vector<1x256xf32>
    %100 = arith.mulf %99, %22 : vector<1x256xf32>
    %101 = arith.mulf %100, %16 : vector<1x256xf32>
    %cst_46 = arith.constant 14.2857141 : f32
    %102 = vector.broadcast %cst_46 : f32 to vector<1x256xf32>
    %103 = arith.mulf %101, %102 : vector<1x256xf32>
    %cst_47 = arith.constant -5.000000e+01 : f32
    %cst_48 = arith.constant 5.000000e+01 : f32
    %104 = vector.broadcast %cst_47 : f32 to vector<1x256xf32>
    %105 = arith.maximumf %104, %103 : vector<1x256xf32>
    %106 = vector.broadcast %cst_48 : f32 to vector<1x256xf32>
    %107 = arith.minimumf %106, %105 : vector<1x256xf32>
    %108 = vector.shape_cast %107 : vector<1x256xf32> to vector<1x1x256xf32>
    %cst_49 = arith.constant dense<0.000000e+00> : vector<1xf32>
    %109 = vector.multi_reduction <add>, %108, %cst_49 [1, 2] : vector<1x1x256xf32> to vector<1xf32>
    %110 = vector.shape_cast %109 : vector<1xf32> to vector<1x1x1xf32>
    %111 = vector.extract %110[0, 0, 0] : f32 from vector<1x1x1xf32>
    %112 = arith.addf %96, %111 : f32
    %c0_50 = arith.constant 0 : index
    %c1_51 = arith.constant 1 : index
    %113 = memref.load %arg7[%c0_50, %c1_51] : memref<1x3xf32, #tpu.memory_space<smem>>
    memref.store %112, %arg7[%c0_50, %c1_51] : memref<1x3xf32, #tpu.memory_space<smem>>
    %c0_52 = arith.constant 0 : index
    %c2 = arith.constant 2 : index
    %114 = memref.load %arg7[%c0_52, %c2] : memref<1x3xf32, #tpu.memory_space<smem>>
    %115 = arith.mulf %8, %6 : vector<4x256xf32>
    %cst_53 = arith.constant dense<0.000000e+00> : vector<256xf32>
    %116 = vector.multi_reduction <add>, %115, %cst_53 [0] : vector<4x256xf32> to vector<256xf32>
    %117 = vector.shape_cast %116 : vector<256xf32> to vector<1x256xf32>
    %118 = arith.mulf %117, %28 : vector<1x256xf32>
    %119 = arith.mulf %118, %22 : vector<1x256xf32>
    %cst_54 = arith.constant 14.2857141 : f32
    %120 = vector.broadcast %cst_54 : f32 to vector<1x256xf32>
    %121 = arith.mulf %119, %120 : vector<1x256xf32>
    %cst_55 = arith.constant -5.000000e+01 : f32
    %cst_56 = arith.constant 5.000000e+01 : f32
    %122 = vector.broadcast %cst_55 : f32 to vector<1x256xf32>
    %123 = arith.maximumf %122, %121 : vector<1x256xf32>
    %124 = vector.broadcast %cst_56 : f32 to vector<1x256xf32>
    %125 = arith.minimumf %124, %123 : vector<1x256xf32>
    %126 = vector.shape_cast %125 : vector<1x256xf32> to vector<1x1x256xf32>
    %cst_57 = arith.constant dense<0.000000e+00> : vector<1xf32>
    %127 = vector.multi_reduction <add>, %126, %cst_57 [1, 2] : vector<1x1x256xf32> to vector<1xf32>
    %128 = vector.shape_cast %127 : vector<1xf32> to vector<1x1x1xf32>
    %129 = vector.extract %128[0, 0, 0] : f32 from vector<1x1x1xf32>
    %130 = arith.addf %114, %129 : f32
    %c0_58 = arith.constant 0 : index
    %c2_59 = arith.constant 2 : index
    %131 = memref.load %arg7[%c0_58, %c2_59] : memref<1x3xf32, #tpu.memory_space<smem>>
    memref.store %130, %arg7[%c0_58, %c2_59] : memref<1x3xf32, #tpu.memory_space<smem>>
    return
  }
  func.func @transform_0(%arg0: i32, %arg1: i32) -> (i32, i32, i32) {
    %c0_i32 = arith.constant 0 : i32
    %c0_i32_0 = arith.constant 0 : i32
    return %arg0, %c0_i32, %arg1 : i32, i32, i32
  }
  func.func @transform_1(%arg0: i32, %arg1: i32) -> (i32, i32, i32) {
    %c0_i32 = arith.constant 0 : i32
    %c0_i32_0 = arith.constant 0 : i32
    return %arg0, %c0_i32, %arg1 : i32, i32, i32
  }
  func.func @transform_2(%arg0: i32, %arg1: i32) -> (i32, i32, i32) {
    %c0_i32 = arith.constant 0 : i32
    %c0_i32_0 = arith.constant 0 : i32
    return %arg0, %c0_i32, %arg1 : i32, i32, i32
  }
  func.func @transform_3(%arg0: i32, %arg1: i32) -> (i32, i32, i32) {
    %c0_i32 = arith.constant 0 : i32
    %c0_i32_0 = arith.constant 0 : i32
    return %arg0, %c0_i32, %arg1 : i32, i32, i32
  }
  func.func @transform_4(%arg0: i32, %arg1: i32) -> (i32, i32, i32) {
    %c0_i32 = arith.constant 0 : i32
    %c0_i32_0 = arith.constant 0 : i32
    return %arg0, %c0_i32, %arg1 : i32, i32, i32
  }
  func.func @transform_5(%arg0: i32, %arg1: i32) -> (i32, i32) {
    %c0_i32 = arith.constant 0 : i32
    %c0_i32_0 = arith.constant 0 : i32
    %c0_i32_1 = arith.constant 0 : i32
    return %c0_i32, %c0_i32_0 : i32, i32
  }
}

module attributes {stable_mosaic.version = 11 : i64} {
  func.func @_pass2_kernel(%arg0: i32, %arg1: i32, %arg2: memref<1x3xf32, #tpu.memory_space<smem>>, %arg3: memref<1x3x256xf32, #tpu.memory_space<vmem>>, %arg4: memref<1x1xf32, #tpu.memory_space<smem>>) attributes {dimension_semantics = [#tpu.dimension_semantics<arbitrary>, #tpu.dimension_semantics<arbitrary>], iteration_bounds = array<i64: 2, 1>, scalar_prefetch = 0 : i64, scratch_operands = 0 : i64, tpu.core_type = #tpu.core_type<tc>, window_params = [{transform_indices = @transform_0, window_bounds = array<i64: 1, 3>}, {transform_indices = @transform_1, window_bounds = array<i64: 1, 3, 256>}, {transform_indices = @transform_2, window_bounds = array<i64: 1, 1>}]} {
    %c0_i32 = arith.constant 0 : i32
    %0 = arith.cmpi eq, %arg0, %c0_i32 : i32
    %c0_i32_0 = arith.constant 0 : i32
    %1 = arith.cmpi eq, %arg1, %c0_i32_0 : i32
    %2 = arith.andi %0, %1 : i1
    %3 = arith.extui %2 : i1 to i32
    %c0_i32_1 = arith.constant 0 : i32
    %4 = arith.cmpi ne, %3, %c0_i32_1 : i32
    scf.if %4 {
      %cst_22 = arith.constant 0.000000e+00 : f32
      %c0_23 = arith.constant 0 : index
      %c0_24 = arith.constant 0 : index
      %53 = memref.load %arg4[%c0_23, %c0_24] : memref<1x1xf32, #tpu.memory_space<smem>>
      memref.store %cst_22, %arg4[%c0_23, %c0_24] : memref<1x1xf32, #tpu.memory_space<smem>>
    } else {
    }
    %c0 = arith.constant 0 : index
    %c0_2 = arith.constant 0 : index
    %5 = memref.load %arg2[%c0, %c0_2] : memref<1x3xf32, #tpu.memory_space<smem>>
    %c0_3 = arith.constant 0 : index
    %c1 = arith.constant 1 : index
    %6 = memref.load %arg2[%c0_3, %c1] : memref<1x3xf32, #tpu.memory_space<smem>>
    %c0_4 = arith.constant 0 : index
    %c2 = arith.constant 2 : index
    %7 = memref.load %arg2[%c0_4, %c2] : memref<1x3xf32, #tpu.memory_space<smem>>
    %c0_5 = arith.constant 0 : index
    %c0_6 = arith.constant 0 : index
    %c0_7 = arith.constant 0 : index
    %8 = vector.load %arg3[%c0_5, %c0_6, %c0_7] : memref<1x3x256xf32, #tpu.memory_space<vmem>>, vector<1x3x256xf32>
    %9 = vector.shape_cast %8 : vector<1x3x256xf32> to vector<3x256xf32>
    %10 = vector.extract_strided_slice %9 {offsets = [0, 0], sizes = [1, 256], strides = [1, 1]} : vector<3x256xf32> to vector<1x256xf32>
    %11 = vector.extract_strided_slice %9 {offsets = [1, 0], sizes = [1, 256], strides = [1, 1]} : vector<3x256xf32> to vector<1x256xf32>
    %12 = vector.extract_strided_slice %9 {offsets = [2, 0], sizes = [1, 256], strides = [1, 1]} : vector<3x256xf32> to vector<1x256xf32>
    %13 = vector.broadcast %5 : f32 to vector<1x256xf32>
    %14 = arith.addf %10, %13 : vector<1x256xf32>
    %cst = arith.constant 9.99999997E-7 : f32
    %15 = vector.broadcast %cst : f32 to vector<1x256xf32>
    %16 = arith.addf %14, %15 : vector<1x256xf32>
    %17 = arith.divf %10, %16 : vector<1x256xf32>
    %cst_8 = arith.constant 9.99999997E-7 : f32
    %18 = vector.broadcast %cst_8 : f32 to vector<1x256xf32>
    %19 = arith.maximumf %17, %18 : vector<1x256xf32>
    %20 = math.log %19 : vector<1x256xf32>
    %cst_9 = arith.constant 0.000000e+00 : f32
    %21 = vector.broadcast %cst_9 : f32 to vector<1x256xf32>
    %22 = arith.subf %21, %20 : vector<1x256xf32>
    %23 = vector.broadcast %6 : f32 to vector<1x256xf32>
    %24 = arith.addf %11, %23 : vector<1x256xf32>
    %cst_10 = arith.constant 9.99999997E-7 : f32
    %25 = vector.broadcast %cst_10 : f32 to vector<1x256xf32>
    %26 = arith.addf %24, %25 : vector<1x256xf32>
    %27 = arith.divf %11, %26 : vector<1x256xf32>
    %cst_11 = arith.constant 9.99999997E-7 : f32
    %28 = vector.broadcast %cst_11 : f32 to vector<1x256xf32>
    %29 = arith.maximumf %27, %28 : vector<1x256xf32>
    %30 = math.log %29 : vector<1x256xf32>
    %cst_12 = arith.constant 0.000000e+00 : f32
    %31 = vector.broadcast %cst_12 : f32 to vector<1x256xf32>
    %32 = arith.subf %31, %30 : vector<1x256xf32>
    %33 = vector.broadcast %7 : f32 to vector<1x256xf32>
    %34 = arith.addf %12, %33 : vector<1x256xf32>
    %cst_13 = arith.constant 9.99999997E-7 : f32
    %35 = vector.broadcast %cst_13 : f32 to vector<1x256xf32>
    %36 = arith.addf %34, %35 : vector<1x256xf32>
    %37 = arith.divf %12, %36 : vector<1x256xf32>
    %cst_14 = arith.constant 9.99999997E-7 : f32
    %38 = vector.broadcast %cst_14 : f32 to vector<1x256xf32>
    %39 = arith.maximumf %37, %38 : vector<1x256xf32>
    %40 = math.log %39 : vector<1x256xf32>
    %cst_15 = arith.constant 0.000000e+00 : f32
    %41 = vector.broadcast %cst_15 : f32 to vector<1x256xf32>
    %42 = arith.subf %41, %40 : vector<1x256xf32>
    %c0_16 = arith.constant 0 : index
    %c0_17 = arith.constant 0 : index
    %43 = memref.load %arg4[%c0_16, %c0_17] : memref<1x1xf32, #tpu.memory_space<smem>>
    %44 = arith.addf %22, %32 : vector<1x256xf32>
    %45 = arith.addf %44, %42 : vector<1x256xf32>
    %46 = vector.shape_cast %45 : vector<1x256xf32> to vector<1x1x256xf32>
    %cst_18 = arith.constant dense<0.000000e+00> : vector<1xf32>
    %47 = vector.multi_reduction <add>, %46, %cst_18 [1, 2] : vector<1x1x256xf32> to vector<1xf32>
    %48 = vector.shape_cast %47 : vector<1xf32> to vector<1x1x1xf32>
    %49 = vector.extract %48[0, 0, 0] : f32 from vector<1x1x1xf32>
    %cst_19 = arith.constant 0.001953125 : f32
    %50 = arith.mulf %49, %cst_19 : f32
    %51 = arith.addf %43, %50 : f32
    %c0_20 = arith.constant 0 : index
    %c0_21 = arith.constant 0 : index
    %52 = memref.load %arg4[%c0_20, %c0_21] : memref<1x1xf32, #tpu.memory_space<smem>>
    memref.store %51, %arg4[%c0_20, %c0_21] : memref<1x1xf32, #tpu.memory_space<smem>>
    return
  }
  func.func @transform_0(%arg0: i32, %arg1: i32) -> (i32, i32) {
    %c0_i32 = arith.constant 0 : i32
    %c0_i32_0 = arith.constant 0 : i32
    %c0_i32_1 = arith.constant 0 : i32
    return %c0_i32, %c0_i32_0 : i32, i32
  }
  func.func @transform_1(%arg0: i32, %arg1: i32) -> (i32, i32, i32) {
    %c0_i32 = arith.constant 0 : i32
    %c0_i32_0 = arith.constant 0 : i32
    return %arg0, %c0_i32, %arg1 : i32, i32, i32
  }
  func.func @transform_2(%arg0: i32, %arg1: i32) -> (i32, i32) {
    %c0_i32 = arith.constant 0 : i32
    %c0_i32_0 = arith.constant 0 : i32
    %c0_i32_1 = arith.constant 0 : i32
    return %c0_i32, %c0_i32_0 : i32, i32
  }
}

</mosaic_0001>

<llo_original>
// kernel: _lambda_.2
$region0: #{_lambda_.2}
  #allocation0 [shape = 'u32[]', space=smem, size = 0x4, offset = 0x4, fixed_abs, tag = 'smem constant byte address 0x4 - core index']
  #allocation1 [shape = 'u32[144,128]{1,0:T(1,128)}', space=vmem, size = 0x12000, scoped, tag = 'internal scratch']
  %s0 = inlined_call_operand.vmem [shape: f32[2,4,256], index: 0, kind: input, shape index: {}]
  %s1 = inlined_call_operand.vmem [shape: f32[2,4,256], index: 1, kind: input, shape index: {}]
  %s2 = inlined_call_operand.vmem [shape: f32[2,4,256], index: 2, kind: input, shape index: {}]
  %s3 = inlined_call_operand.vmem [shape: f32[2,4,256], index: 3, kind: input, shape index: {}]
  %s4 = inlined_call_operand.vmem [shape: f32[2,3,256], index: 4, kind: output, shape index: {0}]
  %s5 = inlined_call_operand.vmem [shape: f32[1,3], index: 5, kind: output, shape index: {1}]
  %6 = xla_tuple %s4, %s5
  %s7 = sld [smem:[#allocation0]]
  $region61: #{_lambda_.2} parent=0
    _
  %s9 = ssub.s32 1, %s7
  %s10 = scalar_select 0, %s9, %s7
  $region1: #{_lambda_.2} parent=0
    #allocation2 [shape = 'u8[512]{0}', space=smem, size = 0x200, scoped, tag = 'output window, operand 1, single buffered']
    #allocation3 [shape = 's32[2]{0}', space=sflag, size = 0x8, scoped, tag = 'scoped memory for _lambda_.2']
    %11 = vsyncpa [#allocation3], 0
    loop: start=0, step=1, limit=4
    $region2: #{_lambda_.2} parent=1 // loop_pre_header
      _
    $region3: #{_lambda_.2} parent=1 // loop_header
      %s13 = sphi 0, %s17
      %p14 = scmp.ge.s32.totalorder %s13, 4
      %s20 = sphi 0, %s32
      %s21 = sphi 0, %s28
      %s22 = sphi 0, %s20
      %s23 = sphi 0, %s21
      %s24 = sphi 0, %s22
      %s25 = sphi 0, %s23
      %s37 = sphi 0, %s39
      %s40 = sphi 0, %s37
      %s41 = sphi 0, %s40
      %s57 = sphi 0, %s41
      %s65 = sphi 0, %s67
      %s68 = sphi 0, %s65
      %s69 = sphi 0, %s68
      %s85 = sphi 0, %s69
      %s93 = sphi 0, %s95
      %s96 = sphi 0, %s93
      %s97 = sphi 0, %s96
      %s113 = sphi 0, %s97
      %s121 = sphi 0, %s123
      %s124 = sphi 0, %s121
      %s125 = sphi 0, %s124
      %s141 = sphi 0, %s125
      %s149 = sphi 0, %s151
      %s152 = sphi 0, %s149
      %s153 = sphi 0, %s152
      %s169 = sphi 0, %s153
      %s173 = sphi 0, %s173
      %s175 = sphi 0, %s173
      %s176 = sphi 0, %s175
      %s190 = sphi 0, %s176
    $region4: #{_lambda_.2} parent=1 // loop_header_branch
      %16 = sbr.rel (%p14) target = $region8
    $region5: #{_lambda_.2} parent=1 // loop_body
      %s18 = ssub.s32 %s13, 1
      %s19 = ssub.s32 %s13, 2
      %s26 = sadd.s32 1, %s21
      %p27 = scmp.ge.s32.totalorder %s26, 1
      %s28 = scalar_select %p27, 0, %s26
      %s29 = sadd.s32 1, %s20
      %s30 = scalar_select %p27, %s29, %s20
      %p31 = scmp.ge.s32.totalorder %s30, 2
      %s32 = scalar_select %p31, 0, %s30
      %s33 = ssub.s32 %s20, %s32
      %s34 = ssub.s32 %s21, %s28
      %s35 = sor.u32 %s33, %s34
      %p36 = scmp.eq.s32.totalorder %s35, 0
      %s38 = sadd.s32 %s37, 1
      %s39 = scalar_select %p36, %s37, %s38
      %p42 = pneg %p36
      %p43 = scmp.eq.s32.totalorder %s13, 1
      %p44 = por %p42, %p43
      %p45 = scmp.ne.s32.totalorder %s37, %s40
      %p46 = scmp.eq.s32.totalorder %s13, 0
      %p47 = por %p45, %p46
      %p48 = scmp.ne.s32.totalorder %s37, %s40
      %p49 = scmp.eq.s32.totalorder %s18, 1
      %p50 = por %p48, %p49
      %p51 = scmp.ne.s32.totalorder %s40, %s41
      %p52 = scmp.eq.s32.totalorder %s18, 0
      %p53 = por %p51, %p52
      %p54 = scmp.ne.s32.totalorder %s40, %s41
      %p55 = scmp.eq.s32.totalorder %s19, 1
      %p56 = por %p54, %p55
      %p58 = scmp.ne.s32.totalorder %s41, %s57
      %p59 = scmp.eq.s32.totalorder %s19, 0
      %p60 = por %p58, %p59
      %s61 = ssub.s32 %s20, %s32
      %s62 = ssub.s32 %s21, %s28
      %s63 = sor.u32 %s61, %s62
      %p64 = scmp.eq.s32.totalorder %s63, 0
      %s66 = sadd.s32 %s65, 1
      %s67 = scalar_select %p64, %s65, %s66
      %p70 = pneg %p64
      %p71 = scmp.eq.s32.totalorder %s13, 1
      %p72 = por %p70, %p71
      %p73 = scmp.ne.s32.totalorder %s65, %s68
      %p74 = scmp.eq.s32.totalorder %s13, 0
      %p75 = por %p73, %p74
      %p76 = scmp.ne.s32.totalorder %s65, %s68
      %p77 = scmp.eq.s32.totalorder %s18, 1
      %p78 = por %p76, %p77
      %p79 = scmp.ne.s32.totalorder %s68, %s69
      %p80 = scmp.eq.s32.totalorder %s18, 0
      %p81 = por %p79, %p80
      %p82 = scmp.ne.s32.totalorder %s68, %s69
      %p83 = scmp.eq.s32.totalorder %s19, 1
      %p84 = por %p82, %p83
      %p86 = scmp.ne.s32.totalorder %s69, %s85
      %p87 = scmp.eq.s32.totalorder %s19, 0
      %p88 = por %p86, %p87
      %s89 = ssub.s32 %s20, %s32
      %s90 = ssub.s32 %s21, %s28
      %s91 = sor.u32 %s89, %s90
      %p92 = scmp.eq.s32.totalorder %s91, 0
      %s94 = sadd.s32 %s93, 1
      %s95 = scalar_select %p92, %s93, %s94
      %p98 = pneg %p92
      %p99 = scmp.eq.s32.totalorder %s13, 1
      %p100 = por %p98, %p99
      %p101 = scmp.ne.s32.totalorder %s93, %s96
      %p102 = scmp.eq.s32.totalorder %s13, 0
      %p103 = por %p101, %p102
      %p104 = scmp.ne.s32.totalorder %s93, %s96
      %p105 = scmp.eq.s32.totalorder %s18, 1
      %p106 = por %p104, %p105
      %p107 = scmp.ne.s32.totalorder %s96, %s97
      %p108 = scmp.eq.s32.totalorder %s18, 0
      %p109 = por %p107, %p108
      %p110 = scmp.ne.s32.totalorder %s96, %s97
      %p111 = scmp.eq.s32.totalorder %s19, 1
      %p112 = por %p110, %p111
      %p114 = scmp.ne.s32.totalorder %s97, %s113
      %p115 = scmp.eq.s32.totalorder %s19, 0
      %p116 = por %p114, %p115
      %s117 = ssub.s32 %s20, %s32
      %s118 = ssub.s32 %s21, %s28
      %s119 = sor.u32 %s117, %s118
      %p120 = scmp.eq.s32.totalorder %s119, 0
      %s122 = sadd.s32 %s121, 1
      %s123 = scalar_select %p120, %s121, %s122
      %p126 = pneg %p120
      %p127 = scmp.eq.s32.totalorder %s13, 1
      %p128 = por %p126, %p127
      %p129 = scmp.ne.s32.totalorder %s121, %s124
      %p130 = scmp.eq.s32.totalorder %s13, 0
      %p131 = por %p129, %p130
      %p132 = scmp.ne.s32.totalorder %s121, %s124
      %p133 = scmp.eq.s32.totalorder %s18, 1
      %p134 = por %p132, %p133
      %p135 = scmp.ne.s32.totalorder %s124, %s125
      %p136 = scmp.eq.s32.totalorder %s18, 0
      %p137 = por %p135, %p136
      %p138 = scmp.ne.s32.totalorder %s124, %s125
      %p139 = scmp.eq.s32.totalorder %s19, 1
      %p140 = por %p138, %p139
      %p142 = scmp.ne.s32.totalorder %s125, %s141
      %p143 = scmp.eq.s32.totalorder %s19, 0
      %p144 = por %p142, %p143
      %s145 = ssub.s32 %s20, %s32
      %s146 = ssub.s32 %s21, %s28
      %s147 = sor.u32 %s145, %s146
      %p148 = scmp.eq.s32.totalorder %s147, 0
      %s150 = sadd.s32 %s149, 1
      %s151 = scalar_select %p148, %s149, %s150
      %p154 = pneg %p148
      %p155 = scmp.eq.s32.totalorder %s13, 1
      %p156 = por %p154, %p155
      %p157 = scmp.ne.s32.totalorder %s149, %s152
      %p158 = scmp.eq.s32.totalorder %s13, 0
      %p159 = por %p157, %p158
      %p160 = scmp.ne.s32.totalorder %s149, %s152
      %p161 = scmp.eq.s32.totalorder %s18, 1
      %p162 = por %p160, %p161
      %p163 = scmp.ne.s32.totalorder %s152, %s153
      %p164 = scmp.eq.s32.totalorder %s18, 0
      %p165 = por %p163, %p164
      %p166 = scmp.ne.s32.totalorder %s152, %s153
      %p167 = scmp.eq.s32.totalorder %s19, 1
      %p168 = por %p166, %p167
      %p170 = scmp.ne.s32.totalorder %s153, %s169
      %p171 = scmp.eq.s32.totalorder %s19, 0
      %p172 = por %p170, %p171
      %s174 = sadd.s32 %s173, 1
      %p177 = scmp.eq.s32.totalorder %s13, 1
      %p178 = scmp.ne.s32.totalorder %s173, %s175
      %p179 = scmp.eq.s32.totalorder %s13, 0
      %p180 = por %p178, %p179
      %p181 = scmp.ne.s32.totalorder %s173, %s175
      %p182 = scmp.eq.s32.totalorder %s18, 1
      %p183 = por %p181, %p182
      %p184 = scmp.ne.s32.totalorder %s175, %s176
      %p185 = scmp.eq.s32.totalorder %s18, 0
      %p186 = por %p184, %p185
      %p187 = scmp.ne.s32.totalorder %s175, %s176
      %p188 = scmp.eq.s32.totalorder %s19, 1
      %p189 = por %p187, %p188
      %p191 = scmp.ne.s32.totalorder %s176, %s190
      %p192 = scmp.eq.s32.totalorder %s19, 0
      %p193 = por %p191, %p192
      %p194 = scmp.le.s32.totalorder 1, %s13
      %p195 = scmp.lt.s32.totalorder %s13, 3
      %p196 = pnand %p194, %p195
      %p197 = pneg %p196
      // Predicated region
      $region9: #{_lambda_.2} parent=5 // pred_check
        _
      $region10: #{_lambda_.2} parent=5 // pred_check_branch
        %199 = sbr.rel (%p196) target = $region12
      $region11: #{_lambda_.2} parent=5 // pred_region
        %s200 = ssub.s32 %s13, 1
      $region12: #{_lambda_.2} parent=5 // pred_fallthru
        _
      %p201 = scmp.lt.s32.totalorder %s13, 2
      // Predicated region
      $region13: #{_lambda_.2} parent=5 // pred_check
        %p202 = pneg %p201
      $region14: #{_lambda_.2} parent=5 // pred_check_branch
        %204 = sbr.rel (%p202) target = $region16
      $region15: #{_lambda_.2} parent=5 // pred_region
        // Predicated region
        $region17: #{_lambda_.2} parent=15 // pred_check
          %p205 = pneg %p47
        $region18: #{_lambda_.2} parent=15 // pred_check_branch
          %207 = sbr.rel (%p205) target = $region20
        $region19: #{_lambda_.2} parent=15 // pred_region
          %s208 = smul.u32 2, %s21
          %p209 = scmp.lt.s32.totalorder %s20, 1
          %s210 = scalar_select %p209, %s20, 1
          %p211 = scmp.lt.s32.totalorder %s208, 1
          %s212 = scalar_select %p211, %s208, 1
          %s213 = smul.addr %s210, 2
          %s214 = sadd.s32 %s212, %s213
          %s215 = smul.addr %s214, 4
          %s216 = scalar_lea.vmem %s0, %s215
          %s217 = smul.u32 2, %s21
        $region20: #{_lambda_.2} parent=15 // pred_fallthru
          _
        // Predicated region
        $region21: #{_lambda_.2} parent=15 // pred_check
          %p218 = pneg %p75
        $region22: #{_lambda_.2} parent=15 // pred_check_branch
          %220 = sbr.rel (%p218) target = $region24
        $region23: #{_lambda_.2} parent=15 // pred_region
          %s221 = smul.u32 2, %s21
          %p222 = scmp.lt.s32.totalorder %s20, 1
          %s223 = scalar_select %p222, %s20, 1
          %p224 = scmp.lt.s32.totalorder %s221, 1
          %s225 = scalar_select %p224, %s221, 1
          %s226 = smul.addr %s223, 2
          %s227 = sadd.s32 %s225, %s226
          %s228 = smul.addr %s227, 4
          %s229 = scalar_lea.vmem %s1, %s228
          %s230 = smul.u32 2, %s21
        $region24: #{_lambda_.2} parent=15 // pred_fallthru
          _
        // Predicated region
        $region25: #{_lambda_.2} parent=15 // pred_check
          %p231 = pneg %p103
        $region26: #{_lambda_.2} parent=15 // pred_check_branch
          %233 = sbr.rel (%p231) target = $region28
        $region27: #{_lambda_.2} parent=15 // pred_region
          %s234 = smul.u32 2, %s21
          %p235 = scmp.lt.s32.totalorder %s20, 1
          %s236 = scalar_select %p235, %s20, 1
          %p237 = scmp.lt.s32.totalorder %s234, 1
          %s238 = scalar_select %p237, %s234, 1
          %s239 = smul.addr %s236, 2
          %s240 = sadd.s32 %s238, %s239
          %s241 = smul.addr %s240, 4
          %s242 = scalar_lea.vmem %s2, %s241
          %s243 = smul.u32 2, %s21
        $region28: #{_lambda_.2} parent=15 // pred_fallthru
          _
        // Predicated region
        $region29: #{_lambda_.2} parent=15 // pred_check
          %p244 = pneg %p131
        $region30: #{_lambda_.2} parent=15 // pred_check_branch
          %246 = sbr.rel (%p244) target = $region32
        $region31: #{_lambda_.2} parent=15 // pred_region
          %s247 = smul.u32 2, %s21
          %p248 = scmp.lt.s32.totalorder %s20, 1
          %s249 = scalar_select %p248, %s20, 1
          %p250 = scmp.lt.s32.totalorder %s247, 1
          %s251 = scalar_select %p250, %s247, 1
          %s252 = smul.addr %s249, 2
          %s253 = sadd.s32 %s251, %s252
          %s254 = smul.addr %s253, 4
          %s255 = scalar_lea.vmem %s3, %s254
          %s256 = smul.u32 2, %s21
        $region32: #{_lambda_.2} parent=15 // pred_fallthru
          _
      $region16: #{_lambda_.2} parent=5 // pred_fallthru
        _
      %p257 = scmp.le.s32.totalorder 1, %s13
      %p258 = scmp.lt.s32.totalorder %s13, 3
      %p259 = pnand %p257, %p258
      %p260 = pneg %p259
      // Predicated region
      $region33: #{_lambda_.2} parent=5 // pred_check
        _
      $region34: #{_lambda_.2} parent=5 // pred_check_branch
        %262 = sbr.rel (%p259) target = $region36
      $region35: #{_lambda_.2} parent=5 // pred_region
        %s263 = ssub.s32 %s13, 1
        %s264 = smul.u32 2, %s23
        %p265 = scmp.lt.s32.totalorder %s22, 1
        %s266 = scalar_select %p265, %s22, 1
        %p267 = scmp.lt.s32.totalorder %s264, 1
        %s268 = scalar_select %p267, %s264, 1
        %s269 = smul.addr %s266, 2
        %s270 = sadd.s32 %s268, %s269
        %s271 = smul.addr %s270, 4
        %s272 = scalar_lea.vmem %s0, %s271
        %p273 = pneg %p53
        %p274 = pneg %p50
        %s275 = smul.u32 2, %s23
        %p276 = scmp.lt.s32.totalorder %s22, 1
        %s277 = scalar_select %p276, %s22, 1
        %p278 = scmp.lt.s32.totalorder %s275, 1
        %s279 = scalar_select %p278, %s275, 1
        %s280 = smul.addr %s277, 2
        %s281 = sadd.s32 %s279, %s280
        %s282 = smul.addr %s281, 4
        %s283 = scalar_lea.vmem %s1, %s282
        %p284 = pneg %p81
        %p285 = pneg %p78
        %s286 = smul.u32 2, %s23
        %p287 = scmp.lt.s32.totalorder %s22, 1
        %s288 = scalar_select %p287, %s22, 1
        %p289 = scmp.lt.s32.totalorder %s286, 1
        %s290 = scalar_select %p289, %s286, 1
        %s291 = smul.addr %s288, 2
        %s292 = sadd.s32 %s290, %s291
        %s293 = smul.addr %s292, 4
        %s294 = scalar_lea.vmem %s2, %s293
        %p295 = pneg %p109
        %p296 = pneg %p106
        %s297 = smul.u32 2, %s23
        %p298 = scmp.lt.s32.totalorder %s22, 1
        %s299 = scalar_select %p298, %s22, 1
        %p300 = scmp.lt.s32.totalorder %s297, 1
        %s301 = scalar_select %p300, %s297, 1
        %s302 = smul.addr %s299, 2
        %s303 = sadd.s32 %s301, %s302
        %s304 = smul.addr %s303, 4
        %s305 = scalar_lea.vmem %s3, %s304
        %p306 = pneg %p137
        %p307 = pneg %p134
        %p308 = pneg %p165
        %p309 = pneg %p162
        %s310 = smul.u32 2, %s23
        %p311 = scmp.lt.s32.totalorder %s22, 1
        %s312 = scalar_select %p311, %s22, 1
        %p313 = scmp.lt.s32.totalorder %s310, 1
        %s314 = scalar_select %p313, %s310, 1
        %s315 = smul.addr %s312, 2
        %s316 = sadd.s32 %s314, %s315
        %s317 = smul.addr %s316, 4
        %s318 = scalar_lea.vmem %s4, %s317
        %p319 = pneg %p186
        %p320 = pneg %p183
        %s321 = smul.u32 2, %s23
        %p322 = scmp.lt.s32.totalorder %s22, 1
        %s323 = scalar_select %p322, %s22, 1
        %p324 = scmp.lt.s32.totalorder %s321, 1
        %s325 = scalar_select %p324, %s321, 1
        %s326 = smul.addr %s323, 2
        %s327 = sadd.s32 %s325, %s326
        %s328 = smul.addr %s327, 4
        %s329 = scalar_lea.vmem %s0, %s328
        %s330 = smul.u32 2, %s23
        %s331 = smul.u32 2, %s23
        %p332 = scmp.lt.s32.totalorder %s22, 1
        %s333 = scalar_select %p332, %s22, 1
        %p334 = scmp.lt.s32.totalorder %s331, 1
        %s335 = scalar_select %p334, %s331, 1
        %s336 = smul.addr %s333, 2
        %s337 = sadd.s32 %s335, %s336
        %s338 = smul.addr %s337, 4
        %s339 = scalar_lea.vmem %s1, %s338
        %s340 = smul.u32 2, %s23
        %s341 = smul.u32 2, %s23
        %p342 = scmp.lt.s32.totalorder %s22, 1
        %s343 = scalar_select %p342, %s22, 1
        %p344 = scmp.lt.s32.totalorder %s341, 1
        %s345 = scalar_select %p344, %s341, 1
        %s346 = smul.addr %s343, 2
        %s347 = sadd.s32 %s345, %s346
        %s348 = smul.addr %s347, 4
        %s349 = scalar_lea.vmem %s2, %s348
        %s350 = smul.u32 2, %s23
        %s351 = smul.u32 2, %s23
        %p352 = scmp.lt.s32.totalorder %s22, 1
        %s353 = scalar_select %p352, %s22, 1
        %p354 = scmp.lt.s32.totalorder %s351, 1
        %s355 = scalar_select %p354, %s351, 1
        %s356 = smul.addr %s353, 2
        %s357 = sadd.s32 %s355, %s356
        %s358 = smul.addr %s357, 4
        %s359 = scalar_lea.vmem %s3, %s358
        %s360 = smul.u32 2, %s23
        %s361 = smul.u32 2, %s23
        %p362 = scmp.lt.s32.totalorder %s22, 1
        %s363 = scalar_select %p362, %s22, 1
        %p364 = scmp.lt.s32.totalorder %s361, 1
        %s365 = scalar_select %p364, %s361, 1
        %s366 = smul.addr %s363, 2
        %s367 = sadd.s32 %s365, %s366
        %s368 = smul.addr %s367, 4
        %s369 = scalar_lea.vmem %s4, %s368
        %s370 = smul.u32 2, %s23
        %p371 = scmp.eq.s32.totalorder %s22, 0
        %p372 = scmp.eq.s32.totalorder %s23, 0
        %p373 = pnand %p371, %p372
        %p374 = pneg %p373
        %v375 = vld [vmem:[%s329] sm:$0xff]
        %v376 = vld [vmem:[%s339] sm:$0xff]
        %v377 = vld [vmem:[%s349] sm:$0xff]
        %v378 = vld [vmem:[%s359] sm:$0xff]
        %v379 = vmul.f32 %v375, %v375
        %v381 = vcombine.high %v379, %v379
        %vm383 = vcmask 1043456
        %v384 = vsel %vm383, %v379, 0.0
        %v385 = vrot.slane %v384, 4
        %v386 = vadd.f32 %v384, %v385
        %v387 = vrot.slane %v386, 2
        %v388 = vadd.f32 %v386, %v387
        %v389 = vrot.slane %v388, 1
        %v390 = vadd.f32 %v388, %v389
        %v391 = vsel %vm383, %v381, 0.0
        %v392 = vrot.slane %v391, 4
        %v393 = vadd.f32 %v391, %v392
        %v394 = vrot.slane %v393, 2
        %v395 = vadd.f32 %v393, %v394
        %v396 = vrot.slane %v395, 1
        %v397 = vadd.f32 %v395, %v396
        %v398 = vrsqrt.pop %v390
        %v399 = vrsqrt.pop %v397
        %v400 = vmin.f32 %v398, 1e+12
        %v401 = vmin.f32 %v399, 1e+12
        %v402 = vmul.f32 %v376, %v376
        %v404 = vcombine.high %v402, %v402
        %v406 = vsel %vm383, %v402, 0.0
        %v407 = vrot.slane %v406, 4
        %v408 = vadd.f32 %v406, %v407
        %v409 = vrot.slane %v408, 2
        %v410 = vadd.f32 %v408, %v409
        %v411 = vrot.slane %v410, 1
        %v412 = vadd.f32 %v410, %v411
        %v413 = vsel %vm383, %v404, 0.0
        %v414 = vrot.slane %v413, 4
        %v415 = vadd.f32 %v413, %v414
        %v416 = vrot.slane %v415, 2
        %v417 = vadd.f32 %v415, %v416
        %v418 = vrot.slane %v417, 1
        %v419 = vadd.f32 %v417, %v418
        %v420 = vrsqrt.pop %v412
        %v421 = vrsqrt.pop %v419
        %v422 = vmin.f32 %v420, 1e+12
        %v423 = vmin.f32 %v421, 1e+12
        %v424 = vmul.f32 %v377, %v377
        %v426 = vcombine.high %v424, %v424
        %v428 = vsel %vm383, %v424, 0.0
        %v429 = vrot.slane %v428, 4
        %v430 = vadd.f32 %v428, %v429
        %v431 = vrot.slane %v430, 2
        %v432 = vadd.f32 %v430, %v431
        %v433 = vrot.slane %v432, 1
        %v434 = vadd.f32 %v432, %v433
        %v435 = vsel %vm383, %v426, 0.0
        %v436 = vrot.slane %v435, 4
        %v437 = vadd.f32 %v435, %v436
        %v438 = vrot.slane %v437, 2
        %v439 = vadd.f32 %v437, %v438
        %v440 = vrot.slane %v439, 1
        %v441 = vadd.f32 %v439, %v440
        %v442 = vrsqrt.pop %v434
        %v443 = vrsqrt.pop %v441
        %v444 = vmin.f32 %v442, 1e+12
        %v445 = vmin.f32 %v443, 1e+12
        %v446 = vmul.f32 %v378, %v378
        %v448 = vcombine.high %v446, %v446
        %v450 = vsel %vm383, %v446, 0.0
        %v451 = vrot.slane %v450, 4
        %v452 = vadd.f32 %v450, %v451
        %v453 = vrot.slane %v452, 2
        %v454 = vadd.f32 %v452, %v453
        %v455 = vrot.slane %v454, 1
        %v456 = vadd.f32 %v454, %v455
        %v457 = vsel %vm383, %v448, 0.0
        %v458 = vrot.slane %v457, 4
        %v459 = vadd.f32 %v457, %v458
        %v460 = vrot.slane %v459, 2
        %v461 = vadd.f32 %v459, %v460
        %v462 = vrot.slane %v461, 1
        %v463 = vadd.f32 %v461, %v462
        %v464 = vrsqrt.pop %v456
        %v465 = vrsqrt.pop %v463
        %v466 = vmin.f32 %v464, 1e+12
        %v467 = vmin.f32 %v465, 1e+12
        %v468 = vmul.f32 %v375, %v378
        %v470 = vcombine.high %v468, %v468
        %v472 = vsel %vm383, %v468, 0.0
        %v473 = vrot.slane %v472, 4
        %v474 = vadd.f32 %v472, %v473
        %v475 = vrot.slane %v474, 2
        %v476 = vadd.f32 %v474, %v475
        %v477 = vrot.slane %v476, 1
        %v478 = vadd.f32 %v476, %v477
        %v479 = vsel %vm383, %v470, 0.0
        %v480 = vrot.slane %v479, 4
        %v481 = vadd.f32 %v479, %v480
        %v482 = vrot.slane %v481, 2
        %v483 = vadd.f32 %v481, %v482
        %v484 = vrot.slane %v483, 1
        %v485 = vadd.f32 %v483, %v484
        %v486 = vmul.f32 %v478, %v400
        %v487 = vmul.f32 %v485, %v401
        %v488 = vmul.f32 %v486, %v466
        %v489 = vmul.f32 %v487, %v467
        %v490 = vmul.f32 %v488, 14.285714
        %v491 = vmul.f32 %v489, 14.285714
        %v492 = vmax.f32 %v490, -50.0
        %v493 = vmax.f32 %v491, -50.0
        %v494 = vmin.f32 %v492, 50.0
        %v495 = vmin.f32 %v493, 50.0
        %v496 = vmul.f32 %v494, 1.442695
        %v497 = vpow.pop %v496
        %v498 = vmul.f32 %v495, 1.442695
        %v499 = vpow.pop %v498
        %v500 = vmul.f32 %v376, %v378
        %v502 = vcombine.high %v500, %v500
        %v504 = vsel %vm383, %v500, 0.0
        %v505 = vrot.slane %v504, 4
        %v506 = vadd.f32 %v504, %v505
        %v507 = vrot.slane %v506, 2
        %v508 = vadd.f32 %v506, %v507
        %v509 = vrot.slane %v508, 1
        %v510 = vadd.f32 %v508, %v509
        %v511 = vsel %vm383, %v502, 0.0
        %v512 = vrot.slane %v511, 4
        %v513 = vadd.f32 %v511, %v512
        %v514 = vrot.slane %v513, 2
        %v515 = vadd.f32 %v513, %v514
        %v516 = vrot.slane %v515, 1
        %v517 = vadd.f32 %v515, %v516
        %v518 = vmul.f32 %v510, %v422
        %v519 = vmul.f32 %v517, %v423
        %v520 = vmul.f32 %v518, %v466
        %v521 = vmul.f32 %v519, %v467
        %v522 = vmul.f32 %v520, 14.285714
        %v523 = vmul.f32 %v521, 14.285714
        %v524 = vmax.f32 %v522, -50.0
        %v525 = vmax.f32 %v523, -50.0
        %v526 = vmin.f32 %v524, 50.0
        %v527 = vmin.f32 %v525, 50.0
        %v528 = vmul.f32 %v526, 1.442695
        %v529 = vpow.pop %v528
        %v530 = vmul.f32 %v527, 1.442695
        %v531 = vpow.pop %v530
        %v532 = vmul.f32 %v377, %v378
        %v534 = vcombine.high %v532, %v532
        %v536 = vsel %vm383, %v532, 0.0
        %v537 = vrot.slane %v536, 4
        %v538 = vadd.f32 %v536, %v537
        %v539 = vrot.slane %v538, 2
        %v540 = vadd.f32 %v538, %v539
        %v541 = vrot.slane %v540, 1
        %v542 = vadd.f32 %v540, %v541
        %v543 = vsel %vm383, %v534, 0.0
        %v544 = vrot.slane %v543, 4
        %v545 = vadd.f32 %v543, %v544
        %v546 = vrot.slane %v545, 2
        %v547 = vadd.f32 %v545, %v546
        %v548 = vrot.slane %v547, 1
        %v549 = vadd.f32 %v547, %v548
        %v550 = vmul.f32 %v542, %v444
        %v551 = vmul.f32 %v549, %v445
        %v552 = vmul.f32 %v550, %v466
        %v553 = vmul.f32 %v551, %v467
        %v554 = vmul.f32 %v552, 14.285714
        %v555 = vmul.f32 %v553, 14.285714
        %v556 = vmax.f32 %v554, -50.0
        %v557 = vmax.f32 %v555, -50.0
        %v558 = vmin.f32 %v556, 50.0
        %v559 = vmin.f32 %v557, 50.0
        %v560 = vmul.f32 %v558, 1.442695
        %v561 = vpow.pop %v560
        %v562 = vmul.f32 %v559, 1.442695
        %v563 = vpow.pop %v562
        %vm564 = vcmask 1040384
        %v565 = vsel %vm564, %v497, %v529
        %v566 = vsel %vm564, %v499, %v531
        %vm567 = vcmask 1041408
        %v568 = vsel %vm567, %v565, %v561
        %v569 = vsel %vm567, %v566, %v563
        %v572 = vcombine.low %v568, %v569
        %574 = vst [vmem:[%s369] sm:$0x77] %v572
        // Predicated region
        $region37: #{_lambda_.2} parent=35 // pred_check
          _
        $region38: #{_lambda_.2} parent=35 // pred_check_branch
          %576 = sbr.rel (%p373) target = $region40
        $region39: #{_lambda_.2} parent=35 // pred_region
          %s577 = scalar_lea.smem [#allocation2], 0
          %578 = sst [smem:[%s577]] 0.0
          %s579 = scalar_lea.smem [#allocation2], 1
          %580 = sst [smem:[%s579]] 0.0
          %s581 = scalar_lea.smem [#allocation2], 2
          %582 = sst [smem:[%s581]] 0.0
        $region40: #{_lambda_.2} parent=35 // pred_fallthru
          _
        %s583 = sld [smem:[#allocation2]]
        %v584 = vmul.f32 %v375, %v377
        %v586 = vcombine.high %v584, %v584
        %v588 = vsel %vm383, %v584, 0.0
        %v589 = vrot.slane %v588, 4
        %v590 = vadd.f32 %v588, %v589
        %v591 = vrot.slane %v590, 2
        %v592 = vadd.f32 %v590, %v591
        %v593 = vrot.slane %v592, 1
        %v594 = vadd.f32 %v592, %v593
        %v595 = vsel %vm383, %v586, 0.0
        %v596 = vrot.slane %v595, 4
        %v597 = vadd.f32 %v595, %v596
        %v598 = vrot.slane %v597, 2
        %v599 = vadd.f32 %v597, %v598
        %v600 = vrot.slane %v599, 1
        %v601 = vadd.f32 %v599, %v600
        %v602 = vmul.f32 %v594, %v400
        %v603 = vmul.f32 %v601, %v401
        %v604 = vmul.f32 %v602, %v444
        %v605 = vmul.f32 %v603, %v445
        %v606 = vmul.f32 %v604, 14.285714
        %v607 = vmul.f32 %v605, 14.285714
        %v608 = vmax.f32 %v606, -50.0
        %v609 = vmax.f32 %v607, -50.0
        %v610 = vmin.f32 %v608, 50.0
        %v611 = vmin.f32 %v609, 50.0
        %v612 = vmul.f32 %v610, 1.442695
        %v613 = vpow.pop %v612
        %v614 = vmul.f32 %v611, 1.442695
        %v615 = vpow.pop %v614
        %v616 = vsel %vm564, %v613, 0.0
        %v617 = vsel %vm564, %v615, 0.0
        %v618 = vadd.f32 %v616, %v617
        %619 = vadd.xlane.f32.xlu0 %v618
        %v620 = vpop.xlane.xlu0 %619
        %v621 = vrot.slane %v620, 4
        %v622 = vadd.f32 %v620, %v621
        %v623 = vrot.slane %v622, 2
        %v624 = vadd.f32 %v622, %v623
        %v625 = vrot.slane %v624, 1
        %v626 = vadd.f32 %v624, %v625
        %s627 = vtos %v626
        %s628 = sadd.f32 %s583, %s627
        %s629 = scalar_lea.smem [#allocation2], 0
        %630 = sst [smem:[%s629]] %s628
        %s631 = sld [smem:[#allocation2 + $0x1]]
        %v632 = vmul.f32 %v376, %v375
        %v634 = vcombine.high %v632, %v632
        %v636 = vsel %vm383, %v632, 0.0
        %v637 = vrot.slane %v636, 4
        %v638 = vadd.f32 %v636, %v637
        %v639 = vrot.slane %v638, 2
        %v640 = vadd.f32 %v638, %v639
        %v641 = vrot.slane %v640, 1
        %v642 = vadd.f32 %v640, %v641
        %v643 = vsel %vm383, %v634, 0.0
        %v644 = vrot.slane %v643, 4
        %v645 = vadd.f32 %v643, %v644
        %v646 = vrot.slane %v645, 2
        %v647 = vadd.f32 %v645, %v646
        %v648 = vrot.slane %v647, 1
        %v649 = vadd.f32 %v647, %v648
        %v650 = vmul.f32 %v642, %v422
        %v651 = vmul.f32 %v649, %v423
        %v652 = vmul.f32 %v650, %v400
        %v653 = vmul.f32 %v651, %v401
        %v654 = vmul.f32 %v652, 14.285714
        %v655 = vmul.f32 %v653, 14.285714
        %v656 = vmax.f32 %v654, -50.0
        %v657 = vmax.f32 %v655, -50.0
        %v658 = vmin.f32 %v656, 50.0
        %v659 = vmin.f32 %v657, 50.0
        %v660 = vsel %vm564, %v658, 0.0
        %v661 = vsel %vm564, %v659, 0.0
        %v662 = vadd.f32 %v660, %v661
        %663 = vadd.xlane.f32.xlu0 %v662
        %v664 = vpop.xlane.xlu0 %663
        %v665 = vrot.slane %v664, 4
        %v666 = vadd.f32 %v664, %v665
        %v667 = vrot.slane %v666, 2
        %v668 = vadd.f32 %v666, %v667
        %v669 = vrot.slane %v668, 1
        %v670 = vadd.f32 %v668, %v669
        %s671 = vtos %v670
        %s672 = sadd.f32 %s631, %s671
        %s673 = scalar_lea.smem [#allocation2], 1
        %674 = sst [smem:[%s673]] %s672
        %s675 = sld [smem:[#allocation2 + $0x2]]
        %v676 = vmul.f32 %v377, %v376
        %v678 = vcombine.high %v676, %v676
        %v680 = vsel %vm383, %v676, 0.0
        %v681 = vrot.slane %v680, 4
        %v682 = vadd.f32 %v680, %v681
        %v683 = vrot.slane %v682, 2
        %v684 = vadd.f32 %v682, %v683
        %v685 = vrot.slane %v684, 1
        %v686 = vadd.f32 %v684, %v685
        %v687 = vsel %vm383, %v678, 0.0
        %v688 = vrot.slane %v687, 4
        %v689 = vadd.f32 %v687, %v688
        %v690 = vrot.slane %v689, 2
        %v691 = vadd.f32 %v689, %v690
        %v692 = vrot.slane %v691, 1
        %v693 = vadd.f32 %v691, %v692
        %v694 = vmul.f32 %v686, %v444
        %v695 = vmul.f32 %v693, %v445
        %v696 = vmul.f32 %v694, %v422
        %v697 = vmul.f32 %v695, %v423
        %v698 = vmul.f32 %v696, 14.285714
        %v699 = vmul.f32 %v697, 14.285714
        %v700 = vmax.f32 %v698, -50.0
        %v701 = vmax.f32 %v699, -50.0
        %v702 = vmin.f32 %v700, 50.0
        %v703 = vmin.f32 %v701, 50.0
        %v704 = vsel %vm564, %v702, 0.0
        %v705 = vsel %vm564, %v703, 0.0
        %v706 = vadd.f32 %v704, %v705
        %707 = vadd.xlane.f32.xlu0 %v706
        %v708 = vpop.xlane.xlu0 %707
        %v709 = vrot.slane %v708, 4
        %v710 = vadd.f32 %v708, %v709
        %v711 = vrot.slane %v710, 2
        %v712 = vadd.f32 %v710, %v711
        %v713 = vrot.slane %v712, 1
        %v714 = vadd.f32 %v712, %v713
        %s715 = vtos %v714
        %s716 = sadd.f32 %s675, %s715
        %s717 = scalar_lea.smem [#allocation2], 2
        %718 = sst [smem:[%s717]] %s716
        %s719 = smul.u32 2, %s23
        %p720 = scmp.lt.s32.totalorder %s22, 1
        %s721 = scalar_select %p720, %s22, 1
        %p722 = scmp.lt.s32.totalorder %s719, 1
        %s723 = scalar_select %p722, %s719, 1
        %s724 = smul.addr %s721, 2
        %s725 = sadd.s32 %s723, %s724
        %s726 = smul.addr %s725, 4
        %s727 = scalar_lea.vmem %s4, %s726
        // Predicated region
        $region41: #{_lambda_.2} parent=35 // pred_check
          %p728 = pneg %p162
        $region42: #{_lambda_.2} parent=35 // pred_check_branch
          %730 = sbr.rel (%p728) target = $region44
        $region43: #{_lambda_.2} parent=35 // pred_region
          %s731 = smul.u32 2, %s23
        $region44: #{_lambda_.2} parent=35 // pred_fallthru
          _
        // Predicated region
        $region45: #{_lambda_.2} parent=35 // pred_check
          %p732 = pneg %p183
        $region46: #{_lambda_.2} parent=35 // pred_check_branch
          %734 = sbr.rel (%p732) target = $region48
        $region47: #{_lambda_.2} parent=35 // pred_region
          %s736 = ssub.s32 16, 16
          %737 = vsyncadd [#allocation3], %s736
          %s739 = sshll.u32 %s5, 4
          %s740 = int_to_ptr.vmem [resolvable:$true] %s739
          %742 = dma.smem_to_vmem [#allocation2], 16, %s740, [#allocation3]
        $region48: #{_lambda_.2} parent=35 // pred_fallthru
          _
        // Predicated region
        $region49: #{_lambda_.2} parent=35 // pred_check
          %p743 = pneg %p183
        $region50: #{_lambda_.2} parent=35 // pred_check_branch
          %745 = sbr.rel (%p743) target = $region52
        $region51: #{_lambda_.2} parent=35 // pred_region
          %746 = dma.done [#allocation3], 16
        $region52: #{_lambda_.2} parent=35 // pred_fallthru
          _
        %747 = sfence
      $region36: #{_lambda_.2} parent=5 // pred_fallthru
        _
      %p748 = scmp.le.s32.totalorder 2, %s13
      // Predicated region
      $region53: #{_lambda_.2} parent=5 // pred_check
        %p749 = pneg %p748
      $region54: #{_lambda_.2} parent=5 // pred_check_branch
        %751 = sbr.rel (%p749) target = $region56
      $region55: #{_lambda_.2} parent=5 // pred_region
        %s752 = ssub.s32 %s13, 2
        // Predicated region
        $region57: #{_lambda_.2} parent=55 // pred_check
          %p753 = pneg %p168
        $region58: #{_lambda_.2} parent=55 // pred_check_branch
          %755 = sbr.rel (%p753) target = $region60
        $region59: #{_lambda_.2} parent=55 // pred_region
          %s756 = smul.u32 2, %s25
          %p757 = scmp.lt.s32.totalorder %s24, 1
          %s758 = scalar_select %p757, %s24, 1
          %p759 = scmp.lt.s32.totalorder %s756, 1
          %s760 = scalar_select %p759, %s756, 1
          %s761 = smul.addr %s758, 2
          %s762 = sadd.s32 %s760, %s761
          %s763 = smul.addr %s762, 4
          %s764 = scalar_lea.vmem %s4, %s763
        $region60: #{_lambda_.2} parent=55 // pred_fallthru
          _
      $region56: #{_lambda_.2} parent=5 // pred_fallthru
        _
    $region6: #{_lambda_.2} parent=1 // loop_footer
      %s17 = sadd.s32 1, %s13
    $region7: #{_lambda_.2} parent=1 // loop_footer_branch
      %12 = sbr.rel target = $region3
    $region8: #{_lambda_.2} parent=1 // loop_exit
      _
    %765 = vsyncpa [#allocation3], 1
    %s766 = scalar_lea.sflag [#allocation3], 1
    %767 = vsyncpa %s766, 1

// kernel: _lambda_.3
$region0: #{_lambda_.3}
  #allocation0 [shape = 'u32[]', space=smem, size = 0x4, offset = 0x4, fixed_abs, tag = 'smem constant byte address 0x4 - core index']
  #allocation1 [shape = 'u32[144,128]{1,0:T(1,128)}', space=vmem, size = 0x12000, scoped, tag = 'internal scratch']
  %s0 = inlined_call_operand.vmem [shape: f32[1,3], index: 0, kind: input, shape index: {}]
  %s1 = inlined_call_operand.vmem [shape: f32[2,3,256], index: 1, kind: input, shape index: {}]
  %s2 = inlined_call_operand.hbm [shape: f32[1,1], index: 2, kind: output, shape index: {}]
  %s3 = sld [smem:[#allocation0]]
  $region49: #{_lambda_.3} parent=0
    _
  %s5 = ssub.s32 1, %s3
  %s6 = scalar_select 0, %s5, %s3
  $region1: #{_lambda_.3} parent=0
    #allocation2 [shape = 'u8[512]{0}', space=smem, size = 0x200, scoped, tag = 'input window, operand 0, single buffered']
    #allocation3 [shape = 's32[2]{0}', space=sflag, size = 0x8, scoped, tag = 'scoped memory for _lambda_.3']
    #allocation4 [shape = 's32[2]{0}', space=sflag, size = 0x8, scoped, tag = 'scoped memory for _lambda_.3']
    #allocation5 [shape = 'u8[512]{0}', space=smem, size = 0x200, scoped, tag = 'output window, operand 0, single buffered']
    %7 = vsyncpa [#allocation4], 0
    %8 = vsyncpa [#allocation3], 0
    loop: start=0, step=1, limit=4
    $region2: #{_lambda_.3} parent=1 // loop_pre_header
      _
    $region3: #{_lambda_.3} parent=1 // loop_header
      %s10 = sphi 0, %s14
      %p11 = scmp.ge.s32.totalorder %s10, 4
      %s17 = sphi 0, %s29
      %s18 = sphi 0, %s25
      %s19 = sphi 0, %s17
      %s20 = sphi 0, %s18
      %s21 = sphi 0, %s19
      %s22 = sphi 0, %s20
      %s30 = sphi 0, %s30
      %s32 = sphi 0, %s30
      %s33 = sphi 0, %s32
      %s47 = sphi 0, %s33
      %s55 = sphi 0, %s57
      %s58 = sphi 0, %s55
      %s59 = sphi 0, %s58
      %s75 = sphi 0, %s59
      %s79 = sphi 0, %s79
      %s81 = sphi 0, %s79
      %s82 = sphi 0, %s81
      %s96 = sphi 0, %s82
    $region4: #{_lambda_.3} parent=1 // loop_header_branch
      %13 = sbr.rel (%p11) target = $region8
    $region5: #{_lambda_.3} parent=1 // loop_body
      %s15 = ssub.s32 %s10, 1
      %s16 = ssub.s32 %s10, 2
      %s23 = sadd.s32 1, %s18
      %p24 = scmp.ge.s32.totalorder %s23, 1
      %s25 = scalar_select %p24, 0, %s23
      %s26 = sadd.s32 1, %s17
      %s27 = scalar_select %p24, %s26, %s17
      %p28 = scmp.ge.s32.totalorder %s27, 2
      %s29 = scalar_select %p28, 0, %s27
      %s31 = sadd.s32 %s30, 1
      %p34 = scmp.eq.s32.totalorder %s10, 1
      %p35 = scmp.ne.s32.totalorder %s30, %s32
      %p36 = scmp.eq.s32.totalorder %s10, 0
      %p37 = por %p35, %p36
      %p38 = scmp.ne.s32.totalorder %s30, %s32
      %p39 = scmp.eq.s32.totalorder %s15, 1
      %p40 = por %p38, %p39
      %p41 = scmp.ne.s32.totalorder %s32, %s33
      %p42 = scmp.eq.s32.totalorder %s15, 0
      %p43 = por %p41, %p42
      %p44 = scmp.ne.s32.totalorder %s32, %s33
      %p45 = scmp.eq.s32.totalorder %s16, 1
      %p46 = por %p44, %p45
      %p48 = scmp.ne.s32.totalorder %s33, %s47
      %p49 = scmp.eq.s32.totalorder %s16, 0
      %p50 = por %p48, %p49
      %s51 = ssub.s32 %s17, %s29
      %s52 = ssub.s32 %s18, %s25
      %s53 = sor.u32 %s51, %s52
      %p54 = scmp.eq.s32.totalorder %s53, 0
      %s56 = sadd.s32 %s55, 1
      %s57 = scalar_select %p54, %s55, %s56
      %p60 = pneg %p54
      %p61 = scmp.eq.s32.totalorder %s10, 1
      %p62 = por %p60, %p61
      %p63 = scmp.ne.s32.totalorder %s55, %s58
      %p64 = scmp.eq.s32.totalorder %s10, 0
      %p65 = por %p63, %p64
      %p66 = scmp.ne.s32.totalorder %s55, %s58
      %p67 = scmp.eq.s32.totalorder %s15, 1
      %p68 = por %p66, %p67
      %p69 = scmp.ne.s32.totalorder %s58, %s59
      %p70 = scmp.eq.s32.totalorder %s15, 0
      %p71 = por %p69, %p70
      %p72 = scmp.ne.s32.totalorder %s58, %s59
      %p73 = scmp.eq.s32.totalorder %s16, 1
      %p74 = por %p72, %p73
      %p76 = scmp.ne.s32.totalorder %s59, %s75
      %p77 = scmp.eq.s32.totalorder %s16, 0
      %p78 = por %p76, %p77
      %s80 = sadd.s32 %s79, 1
      %p83 = scmp.eq.s32.totalorder %s10, 1
      %p84 = scmp.ne.s32.totalorder %s79, %s81
      %p85 = scmp.eq.s32.totalorder %s10, 0
      %p86 = por %p84, %p85
      %p87 = scmp.ne.s32.totalorder %s79, %s81
      %p88 = scmp.eq.s32.totalorder %s15, 1
      %p89 = por %p87, %p88
      %p90 = scmp.ne.s32.totalorder %s81, %s82
      %p91 = scmp.eq.s32.totalorder %s15, 0
      %p92 = por %p90, %p91
      %p93 = scmp.ne.s32.totalorder %s81, %s82
      %p94 = scmp.eq.s32.totalorder %s16, 1
      %p95 = por %p93, %p94
      %p97 = scmp.ne.s32.totalorder %s82, %s96
      %p98 = scmp.eq.s32.totalorder %s16, 0
      %p99 = por %p97, %p98
      %p100 = scmp.le.s32.totalorder 1, %s10
      %p101 = scmp.lt.s32.totalorder %s10, 3
      %p102 = pnand %p100, %p101
      %p103 = pneg %p102
      // Predicated region
      $region9: #{_lambda_.3} parent=5 // pred_check
        _
      $region10: #{_lambda_.3} parent=5 // pred_check_branch
        %105 = sbr.rel (%p102) target = $region12
      $region11: #{_lambda_.3} parent=5 // pred_region
        %s106 = ssub.s32 %s10, 1
        // Predicated region
        $region13: #{_lambda_.3} parent=11 // pred_check
          %p107 = pneg %p43
        $region14: #{_lambda_.3} parent=11 // pred_check_branch
          %109 = sbr.rel (%p107) target = $region16
        $region15: #{_lambda_.3} parent=11 // pred_region
          %s111 = ssub.s32 16, 16
          %112 = vsyncadd [#allocation4], %s111
          %s114 = sshll.u32 %s0, 4
          %s115 = int_to_ptr.vmem [resolvable:$true] %s114
          %117 = dma.vmem_to_smem %s115, 16, [#allocation2], [#allocation4]
        $region16: #{_lambda_.3} parent=11 // pred_fallthru
          _
      $region12: #{_lambda_.3} parent=5 // pred_fallthru
        _
      %p118 = scmp.lt.s32.totalorder %s10, 2
      // Predicated region
      $region17: #{_lambda_.3} parent=5 // pred_check
        %p119 = pneg %p118
      $region18: #{_lambda_.3} parent=5 // pred_check_branch
        %121 = sbr.rel (%p119) target = $region20
      $region19: #{_lambda_.3} parent=5 // pred_region
        // Predicated region
        $region21: #{_lambda_.3} parent=19 // pred_check
          %p122 = pneg %p65
        $region22: #{_lambda_.3} parent=19 // pred_check_branch
          %124 = sbr.rel (%p122) target = $region24
        $region23: #{_lambda_.3} parent=19 // pred_region
          %s125 = smul.u32 2, %s18
          %p126 = scmp.lt.s32.totalorder %s17, 1
          %s127 = scalar_select %p126, %s17, 1
          %p128 = scmp.lt.s32.totalorder %s125, 1
          %s129 = scalar_select %p128, %s125, 1
          %s130 = smul.addr %s127, 2
          %s131 = sadd.s32 %s129, %s130
          %s132 = smul.addr %s131, 4
          %s133 = scalar_lea.vmem %s1, %s132
          %s134 = smul.u32 2, %s18
        $region24: #{_lambda_.3} parent=19 // pred_fallthru
          _
      $region20: #{_lambda_.3} parent=5 // pred_fallthru
        _
      %p135 = scmp.le.s32.totalorder 1, %s10
      %p136 = scmp.lt.s32.totalorder %s10, 3
      %p137 = pnand %p135, %p136
      %p138 = pneg %p137
      // Predicated region
      $region25: #{_lambda_.3} parent=5 // pred_check
        _
      $region26: #{_lambda_.3} parent=5 // pred_check_branch
        %140 = sbr.rel (%p137) target = $region28
      $region27: #{_lambda_.3} parent=5 // pred_region
        %s141 = ssub.s32 %s10, 1
        // Predicated region
        $region29: #{_lambda_.3} parent=27 // pred_check
          %p142 = pneg %p43
        $region30: #{_lambda_.3} parent=27 // pred_check_branch
          %144 = sbr.rel (%p142) target = $region32
        $region31: #{_lambda_.3} parent=27 // pred_region
          %145 = dma.done [#allocation4], 16
        $region32: #{_lambda_.3} parent=27 // pred_fallthru
          _
        %146 = sfence
        %p147 = pneg %p43
        %p148 = pneg %p40
        %s149 = smul.u32 2, %s20
        %p150 = scmp.lt.s32.totalorder %s19, 1
        %s151 = scalar_select %p150, %s19, 1
        %p152 = scmp.lt.s32.totalorder %s149, 1
        %s153 = scalar_select %p152, %s149, 1
        %s154 = smul.addr %s151, 2
        %s155 = sadd.s32 %s153, %s154
        %s156 = smul.addr %s155, 4
        %s157 = scalar_lea.vmem %s1, %s156
        %p158 = pneg %p71
        %p159 = pneg %p68
        %p160 = pneg %p92
        %p161 = pneg %p89
        %s162 = smul.u32 2, %s20
        %p163 = scmp.lt.s32.totalorder %s19, 1
        %s164 = scalar_select %p163, %s19, 1
        %p165 = scmp.lt.s32.totalorder %s162, 1
        %s166 = scalar_select %p165, %s162, 1
        %s167 = smul.addr %s164, 2
        %s168 = sadd.s32 %s166, %s167
        %s169 = smul.addr %s168, 4
        %s170 = scalar_lea.vmem %s1, %s169
        %s171 = smul.u32 2, %s20
        %p172 = scmp.eq.s32.totalorder %s19, 0
        %p173 = scmp.eq.s32.totalorder %s20, 0
        %p174 = pnand %p172, %p173
        %p175 = pneg %p174
        // Predicated region
        $region33: #{_lambda_.3} parent=27 // pred_check
          _
        $region34: #{_lambda_.3} parent=27 // pred_check_branch
          %177 = sbr.rel (%p174) target = $region36
        $region35: #{_lambda_.3} parent=27 // pred_region
          %s178 = scalar_lea.smem [#allocation5], 0
          %179 = sst [smem:[%s178]] 0.0
        $region36: #{_lambda_.3} parent=27 // pred_fallthru
          _
        %s180 = sld [smem:[#allocation2]]
        %s181 = sld [smem:[#allocation2 + $0x1]]
        %s182 = sld [smem:[#allocation2 + $0x2]]
        %v183 = vld [vmem:[%s170] sm:$0x77]
        %v184 = vstv %s180
        %v185 = vadd.f32 %v183, %v184
        %v186 = vadd.f32 %v185, 1e-06
        %v187 = vrcp.pop %v186
        %v188 = vmul.f32 %v183, %v187
        %v189 = vmax.f32 %v188, 1e-06
        %v190 = vlog2.pop %v189
        %v191 = vmul.f32 %v190, 0.6931472
        %v192 = vsub.f32 0.0, %v191
        %v193 = vstv %s181
        %v194 = vadd.f32 %v183, %v193
        %v195 = vadd.f32 %v194, 1e-06
        %v196 = vrcp.pop %v195
        %v197 = vmul.f32 %v183, %v196
        %v198 = vmax.f32 %v197, 1e-06
        %v199 = vlog2.pop %v198
        %v200 = vmul.f32 %v199, 0.6931472
        %v201 = vsub.f32 0.0, %v200
        %v202 = vstv %s182
        %v203 = vadd.f32 %v183, %v202
        %v204 = vadd.f32 %v203, 1e-06
        %v205 = vrcp.pop %v204
        %v206 = vmul.f32 %v183, %v205
        %v207 = vmax.f32 %v206, 1e-06
        %v208 = vlog2.pop %v207
        %v209 = vmul.f32 %v208, 0.6931472
        %v210 = vsub.f32 0.0, %v209
        %s211 = sld [smem:[#allocation5]]
        %v213 = vrot.slane %v201, 5
        %v214 = vrot.slane %v213, 4
        %v216 = vadd.f32 %v192, %v214
        %v218 = vrot.slane %v210, 6
        %v219 = vrot.slane %v218, 4
        %v221 = vadd.f32 %v216, %v219
        %v223 = vlaneseq
        %v224 = vshrl.u32 %v223, 7
        %v225 = vsub.s32 0, %v224
        %v226 = vrot.slane %v221, %v225
        %v227 = vlaneseq
        %v228 = vshrl.u32 %v227, 7
        %v229 = vsub.s32 4, %v228
        %v230 = vrot.slane %v221, %v229
        %vm233 = vcmask 1040384
        %v234 = vsel %vm233, %v226, 0.0
        %v235 = vsel %vm233, %v230, 0.0
        %v236 = vadd.f32 %v234, %v235
        %237 = vadd.xlane.f32.xlu0 %v236
        %v238 = vpop.xlane.xlu0 %237
        %v239 = vrot.slane %v238, 4
        %v240 = vadd.f32 %v238, %v239
        %v241 = vrot.slane %v240, 2
        %v242 = vadd.f32 %v240, %v241
        %v243 = vrot.slane %v242, 1
        %v244 = vadd.f32 %v242, %v243
        %s245 = vtos %v244
        %s246 = smul.f32 %s245, 0.001953125
        %s247 = sadd.f32 %s211, %s246
        %s248 = scalar_lea.smem [#allocation5], 0
        %249 = sst [smem:[%s248]] %s247
        // Predicated region
        $region37: #{_lambda_.3} parent=27 // pred_check
          %p250 = pneg %p89
        $region38: #{_lambda_.3} parent=27 // pred_check_branch
          %252 = sbr.rel (%p250) target = $region40
        $region39: #{_lambda_.3} parent=27 // pred_region
          %s254 = ssub.s32 16, 16
          %255 = vsyncadd [#allocation3], %s254
          %258 = dma.smem_to_hbm [#allocation5], 16, %s2, [#allocation3]
        $region40: #{_lambda_.3} parent=27 // pred_fallthru
          _
        // Predicated region
        $region41: #{_lambda_.3} parent=27 // pred_check
          %p259 = pneg %p89
        $region42: #{_lambda_.3} parent=27 // pred_check_branch
          %261 = sbr.rel (%p259) target = $region44
        $region43: #{_lambda_.3} parent=27 // pred_region
          %262 = dma.done [#allocation3], 16
        $region44: #{_lambda_.3} parent=27 // pred_fallthru
          _
        %263 = sfence
      $region28: #{_lambda_.3} parent=5 // pred_fallthru
        _
      %p264 = scmp.le.s32.totalorder 2, %s10
      // Predicated region
      $region45: #{_lambda_.3} parent=5 // pred_check
        %p265 = pneg %p264
      $region46: #{_lambda_.3} parent=5 // pred_check_branch
        %267 = sbr.rel (%p265) target = $region48
      $region47: #{_lambda_.3} parent=5 // pred_region
        %s268 = ssub.s32 %s10, 2
      $region48: #{_lambda_.3} parent=5 // pred_fallthru
        _
    $region6: #{_lambda_.3} parent=1 // loop_footer
      %s14 = sadd.s32 1, %s10
    $region7: #{_lambda_.3} parent=1 // loop_footer_branch
      %9 = sbr.rel target = $region3
    $region8: #{_lambda_.3} parent=1 // loop_exit
      _
    %269 = vsyncpa [#allocation3], 1
    %s270 = scalar_lea.sflag [#allocation3], 1
    %271 = vsyncpa %s270, 1
    %272 = vsyncpa [#allocation4], 1
    %s273 = scalar_lea.sflag [#allocation4], 1
    %274 = vsyncpa %s273, 1

</llo_original>
